<compile_context>
chip_gen: v6e
topology: v6e:2x2x1
jax: 0.10.0
libtpu: 0.0.40
codegen_flags: <defaults>
</compile_context>

<pallas_src>
import jax
import jax.numpy as jnp
from jax.experimental import pallas as pl
from jax.experimental.pallas import tpu as pltpu


def _round_up(x, m):
    return ((x + m - 1) // m) * m


def _round_down(x, m):
    return (x // m) * m


def _upsample2x_kernel(x_ref, e_ref, o_ref):
    # x_ref: (R, W) input rows; e_ref: (W, 2W) 0/1 interleave matrix;
    # o_ref: (R, 4W) output rows (two upsampled rows back-to-back per input row).
    w = e_ref.shape[0]
    x = x_ref[...].astype(jnp.float32)
    # Width interleave on the (otherwise idle) MXU:
    #   wide[:, 2j] = wide[:, 2j+1] = x[:, j]
    wide = jnp.dot(x, e_ref[...], preferred_element_type=jnp.float32).astype(o_ref.dtype)
    # Row duplication == two lane-dense stores into the (R, 4W) view.
    o_ref[:, : 2 * w] = wide
    o_ref[:, 2 * w:] = wide


def _tpu_budgets():
    """(pipeline VMEM footprint budget, vmem_limit_bytes), generation-aware."""
    try:
        kind = jax.devices()[0].device_kind.lower()
    except Exception:
        kind = ""
    if ("v5" in kind) or ("v6" in kind):
        # 128 MiB physical VMEM: grow blocks for long DMAs (matters most on v5e).
        return 80 * 1024 * 1024, 96 * 1024 * 1024
    # v7x (64 MiB physical VMEM) and unknown generations: stay conservative.
    return 36 * 1024 * 1024, 48 * 1024 * 1024


def upsample_nearest_2x(x):
    """x: (N, C, H, W) -> (N, C, 2H, 2W), nearest-neighbor 2x upsample."""
    N, C, H, W = x.shape
    rows = N * C * H
    itemsize = jnp.dtype(x.dtype).itemsize

    # Sublane multiple for the row (second-to-last) block dim.
    sub = {4: 8, 2: 16, 1: 32}.get(itemsize, 8)

    # Per-row padded VMEM bytes: double-buffered input + output blocks, plus the
    # in-kernel f32 temporaries (x cast + wide).  Lane padding (W -> 128) included.
    in_row = _round_up(W, 128) * itemsize
    out_row = _round_up(4 * W, 128) * itemsize
    tmp_row = (_round_up(W, 128) + _round_up(2 * W, 128)) * 4
    per_row = 2 * in_row + 2 * out_row + tmp_row
    e_bytes = _round_up(W, 8) * _round_up(2 * W, 128) * 4

    budget, vmem_limit = _tpu_budgets()
    r_budget = max(sub, _round_down(max(0, budget - 2 * e_bytes) // per_row, sub))
    # Keep >= 4 grid steps when the tensor allows: overlaps fetch/compute/writeback
    # and gives the second TensorCore on v7x work.
    r_steps = max(sub, _round_down(rows // 4, sub))
    r = int(min(r_budget, r_steps))

    grid = (pl.cdiv(rows, r),)

    xr = x.reshape(rows, W)  # free reshape: NCHW is row-major contiguous

    # Constant 0/1 width-interleave matrix: E[j, 2j] = E[j, 2j+1] = 1.
    col = jnp.arange(2 * W) // 2
    e = (jnp.arange(W)[:, None] == col[None, :]).astype(jnp.float32)

    out_flat = pl.pallas_call(
        _upsample2x_kernel,
        out_shape=jax.ShapeDtypeStruct((rows, 4 * W), x.dtype),
        grid_spec=pltpu.PrefetchScalarGridSpec(
            num_scalar_prefetch=0,
            grid=grid,
            in_specs=[
                pl.BlockSpec((r, W), lambda k: (k, 0)),
                pl.BlockSpec((W, 2 * W), lambda k: (0, 0)),  # resident constant
            ],
            out_specs=pl.BlockSpec((r, 4 * W), lambda k: (k, 0)),
        ),
        compiler_params=pltpu.CompilerParams(
            dimension_semantics=("parallel",),
            vmem_limit_bytes=vmem_limit,
        ),
        cost_estimate=pl.CostEstimate(
            flops=0,
            transcendentals=0,
            bytes_accessed=int(5 * rows * W * itemsize),
        ),
    )(xr, e)

    # (rows, 4W) row-major == (N, C, 2H, 2W) row-major.
    return out_flat.reshape(N, C, 2 * H, 2 * W)


class Upsample:
    """JAX mirror of the PyTorch module; nn.Upsample(2) in __init__ is unused
    by forward (no parameters), forward is nearest 2x interpolation."""

    def __call__(self, x):
        return upsample_nearest_2x(x)


if __name__ == "__main__":
    key = jax.random.PRNGKey(0)
    x = jax.random.normal(key, (2, 4, 16, 16), dtype=jnp.float32)

    model = Upsample()
    out = jax.block_until_ready(model(x))

    # Reference: nearest-neighbor repeat along H and W.
    ref = jnp.repeat(jnp.repeat(x, 2, axis=2), 2, axis=3)

    assert out.shape == (2, 4, 32, 32), out.shape
    assert out.dtype == x.dtype
    assert jnp.allclose(out, ref), "mismatch vs reference nearest upsample"

    print("KERNEL_OK")
</pallas_src>

<mosaic_0001>
module attributes {stable_mosaic.version = 11 : i64} {
  func.func @_upsample2x_kernel(%arg0: i32, %arg1: memref<32x16xf32, #tpu.memory_space<vmem>>, %arg2: memref<16x32xf32, #tpu.memory_space<vmem>>, %arg3: memref<32x64xf32, #tpu.memory_space<vmem>>) attributes {dimension_semantics = [#tpu.dimension_semantics<parallel>], iteration_bounds = array<i64: 4>, scalar_prefetch = 0 : i64, scratch_operands = 0 : i64, tpu.core_type = #tpu.core_type<tc>, window_params = [{transform_indices = @transform_0, window_bounds = array<i64: 32, 16>}, {pipeline_mode = #tpu.pipeline_mode<synchronous>, transform_indices = @transform_1, window_bounds = array<i64: 16, 32>}, {transform_indices = @transform_2, window_bounds = array<i64: 32, 64>}]} {
    %c0 = arith.constant 0 : index
    %c0_0 = arith.constant 0 : index
    %0 = vector.load %arg1[%c0, %c0_0] : memref<32x16xf32, #tpu.memory_space<vmem>>, vector<32x16xf32>
    %c0_1 = arith.constant 0 : index
    %c0_2 = arith.constant 0 : index
    %1 = vector.load %arg2[%c0_1, %c0_2] : memref<16x32xf32, #tpu.memory_space<vmem>>, vector<16x32xf32>
    %cst = arith.constant dense<0.000000e+00> : vector<32x32xf32>
    %2 = tpu.matmul %0, %1, %cst {dimension_numbers = #tpu.dot_dimension_numbers<[1], [0], [0], [1], [0, 0, 1, 1], [], []>} : vector<32x16xf32>, vector<16x32xf32>, vector<32x32xf32> -> vector<32x32xf32>
    %c0_3 = arith.constant 0 : index
    %c0_4 = arith.constant 0 : index
    %3 = vector.load %arg3[%c0_3, %c0_4] : memref<32x64xf32, #tpu.memory_space<vmem>>, vector<32x32xf32>
    tpu.vector_store %arg3[%c0_3, %c0_4], %2 {strides = array<i32>} : memref<32x64xf32, #tpu.memory_space<vmem>>, vector<32x32xf32>,
    %c0_5 = arith.constant 0 : index
    %c32 = arith.constant 32 : index
    %4 = vector.load %arg3[%c0_5, %c32] : memref<32x64xf32, #tpu.memory_space<vmem>>, vector<32x32xf32>
    tpu.vector_store %arg3[%c0_5, %c32], %2 {strides = array<i32>} : memref<32x64xf32, #tpu.memory_space<vmem>>, vector<32x32xf32>,
    return
  }
  func.func @transform_0(%arg0: i32) -> (i32, i32) {
    %c0_i32 = arith.constant 0 : i32
    %c0_i32_0 = arith.constant 0 : i32
    return %arg0, %c0_i32 : i32, i32
  }
  func.func @transform_1(%arg0: i32) -> (i32, i32) {
    %c0_i32 = arith.constant 0 : i32
    %c0_i32_0 = arith.constant 0 : i32
    %c0_i32_1 = arith.constant 0 : i32
    return %c0_i32, %c0_i32_0 : i32, i32
  }
  func.func @transform_2(%arg0: i32) -> (i32, i32) {
    %c0_i32 = arith.constant 0 : i32
    %c0_i32_0 = arith.constant 0 : i32
    return %arg0, %c0_i32 : i32, i32
  }
}

</mosaic_0001>

<llo_original>
// kernel: tpu_custom_call.1
$region0: #{tpu_custom_call.1}
  #allocation0 [shape = 'u32[]', space=smem, size = 0x4, offset = 0x4, fixed_abs, tag = 'smem constant byte address 0x4 - core index']
  #allocation1 [shape = 'u32[144,128]{1,0:T(1,128)}', space=vmem, size = 0x12000, scoped, tag = 'internal scratch']
  %s0 = inlined_call_operand.vmem [shape: f32[128,16], index: 0, kind: input, shape index: {}]
  %s1 = inlined_call_operand.vmem [shape: f32[16,32], index: 1, kind: input, shape index: {}]
  %s2 = inlined_call_operand.vmem [shape: f32[128,64], index: 2, kind: output, shape index: {}]
  %s3 = sld [smem:[#allocation0]]
  $region41: #{tpu_custom_call.1} parent=0
    _
  %s5 = ssub.s32 1, %s3
  %s6 = scalar_select 0, %s5, %s3
  loop: start=0, step=1, limit=6
  $region2: #{tpu_custom_call.1} parent=0 // loop_pre_header
    _
  $region3: #{tpu_custom_call.1} parent=0 // loop_header
    %s8 = sphi 0, %s12
    %p9 = scmp.ge.s32.totalorder %s8, 6
    %s18 = sphi 0, %s20
    %s21 = sphi 0, %s18
    %s22 = sphi 0, %s21
    %s38 = sphi 0, %s22
    %s42 = sphi 0, %s42
    %s44 = sphi 0, %s42
    %s45 = sphi 0, %s44
    %s59 = sphi 0, %s45
    %s65 = sphi 0, %s67
    %s68 = sphi 0, %s65
    %s69 = sphi 0, %s68
    %s85 = sphi 0, %s69
  $region4: #{tpu_custom_call.1} parent=0 // loop_header_branch
    %11 = sbr.rel (%p9) target = $region8
  $region5: #{tpu_custom_call.1} parent=0 // loop_body
    %s13 = ssub.s32 %s8, 1
    %s14 = ssub.s32 %s8, 2
    %s15 = sadd.s32 %s8, 1
    %s16 = ssub.s32 %s8, %s15
    %p17 = scmp.eq.s32.totalorder %s16, 0
    %s19 = sadd.s32 %s18, 1
    %s20 = scalar_select %p17, %s18, %s19
    %p23 = pneg %p17
    %p24 = scmp.eq.s32.totalorder %s8, 3
    %p25 = por %p23, %p24
    %p26 = scmp.ne.s32.totalorder %s18, %s21
    %p27 = scmp.eq.s32.totalorder %s8, 0
    %p28 = por %p26, %p27
    %p29 = scmp.ne.s32.totalorder %s18, %s21
    %p30 = scmp.eq.s32.totalorder %s13, 3
    %p31 = por %p29, %p30
    %p32 = scmp.ne.s32.totalorder %s21, %s22
    %p33 = scmp.eq.s32.totalorder %s13, 0
    %p34 = por %p32, %p33
    %p35 = scmp.ne.s32.totalorder %s21, %s22
    %p36 = scmp.eq.s32.totalorder %s14, 3
    %p37 = por %p35, %p36
    %p39 = scmp.ne.s32.totalorder %s22, %s38
    %p40 = scmp.eq.s32.totalorder %s14, 0
    %p41 = por %p39, %p40
    %s43 = sadd.s32 %s42, 1
    %p46 = scmp.eq.s32.totalorder %s8, 3
    %p47 = scmp.ne.s32.totalorder %s42, %s44
    %p48 = scmp.eq.s32.totalorder %s8, 0
    %p49 = por %p47, %p48
    %p50 = scmp.ne.s32.totalorder %s42, %s44
    %p51 = scmp.eq.s32.totalorder %s13, 3
    %p52 = por %p50, %p51
    %p53 = scmp.ne.s32.totalorder %s44, %s45
    %p54 = scmp.eq.s32.totalorder %s13, 0
    %p55 = por %p53, %p54
    %p56 = scmp.ne.s32.totalorder %s44, %s45
    %p57 = scmp.eq.s32.totalorder %s14, 3
    %p58 = por %p56, %p57
    %p60 = scmp.ne.s32.totalorder %s45, %s59
    %p61 = scmp.eq.s32.totalorder %s14, 0
    %p62 = por %p60, %p61
    %s63 = ssub.s32 %s8, %s15
    %p64 = scmp.eq.s32.totalorder %s63, 0
    %s66 = sadd.s32 %s65, 1
    %s67 = scalar_select %p64, %s65, %s66
    %p70 = pneg %p64
    %p71 = scmp.eq.s32.totalorder %s8, 3
    %p72 = por %p70, %p71
    %p73 = scmp.ne.s32.totalorder %s65, %s68
    %p74 = scmp.eq.s32.totalorder %s8, 0
    %p75 = por %p73, %p74
    %p76 = scmp.ne.s32.totalorder %s65, %s68
    %p77 = scmp.eq.s32.totalorder %s13, 3
    %p78 = por %p76, %p77
    %p79 = scmp.ne.s32.totalorder %s68, %s69
    %p80 = scmp.eq.s32.totalorder %s13, 0
    %p81 = por %p79, %p80
    %p82 = scmp.ne.s32.totalorder %s68, %s69
    %p83 = scmp.eq.s32.totalorder %s14, 3
    %p84 = por %p82, %p83
    %p86 = scmp.ne.s32.totalorder %s69, %s85
    %p87 = scmp.eq.s32.totalorder %s14, 0
    %p88 = por %p86, %p87
    %p89 = scmp.le.s32.totalorder 1, %s8
    %p90 = scmp.lt.s32.totalorder %s8, 5
    %p91 = pnand %p89, %p90
    %p92 = pneg %p91
    // Predicated region
    $region9: #{tpu_custom_call.1} parent=5 // pred_check
      _
    $region10: #{tpu_custom_call.1} parent=5 // pred_check_branch
      %94 = sbr.rel (%p91) target = $region12
    $region11: #{tpu_custom_call.1} parent=5 // pred_region
      %s95 = ssub.s32 %s8, 1
      // Predicated region
      $region13: #{tpu_custom_call.1} parent=11 // pred_check
        %p96 = pneg %p55
      $region14: #{tpu_custom_call.1} parent=11 // pred_check_branch
        %98 = sbr.rel (%p96) target = $region16
      $region15: #{tpu_custom_call.1} parent=11 // pred_region
        _
      $region16: #{tpu_custom_call.1} parent=11 // pred_fallthru
        _
    $region12: #{tpu_custom_call.1} parent=5 // pred_fallthru
      _
    %p99 = scmp.lt.s32.totalorder %s8, 4
    // Predicated region
    $region17: #{tpu_custom_call.1} parent=5 // pred_check
      %p100 = pneg %p99
    $region18: #{tpu_custom_call.1} parent=5 // pred_check_branch
      %102 = sbr.rel (%p100) target = $region20
    $region19: #{tpu_custom_call.1} parent=5 // pred_region
      // Predicated region
      $region21: #{tpu_custom_call.1} parent=19 // pred_check
        %p103 = pneg %p28
      $region22: #{tpu_custom_call.1} parent=19 // pred_check_branch
        %105 = sbr.rel (%p103) target = $region24
      $region23: #{tpu_custom_call.1} parent=19 // pred_region
        %s106 = smul.u32 4, %s8
        %p107 = scmp.lt.s32.totalorder %s106, 15
        %s108 = scalar_select %p107, %s106, 15
        %s109 = smul.addr %s108, 8
        %s110 = scalar_lea.vmem %s0, %s109
        %s111 = smul.u32 4, %s8
      $region24: #{tpu_custom_call.1} parent=19 // pred_fallthru
        _
    $region20: #{tpu_custom_call.1} parent=5 // pred_fallthru
      _
    %p112 = scmp.le.s32.totalorder 1, %s8
    %p113 = scmp.lt.s32.totalorder %s8, 5
    %p114 = pnand %p112, %p113
    %p115 = pneg %p114
    // Predicated region
    $region25: #{tpu_custom_call.1} parent=5 // pred_check
      _
    $region26: #{tpu_custom_call.1} parent=5 // pred_check_branch
      %117 = sbr.rel (%p114) target = $region28
    $region27: #{tpu_custom_call.1} parent=5 // pred_region
      %s118 = ssub.s32 %s8, 1
      %s119 = smul.u32 4, %s13
      %p120 = scmp.lt.s32.totalorder %s119, 15
      %s121 = scalar_select %p120, %s119, 15
      %s122 = smul.addr %s121, 8
      %s123 = scalar_lea.vmem %s0, %s122
      %p124 = pneg %p34
      %p125 = pneg %p31
      %p126 = pneg %p55
      %p127 = pneg %p52
      %p128 = pneg %p81
      %p129 = pneg %p78
      %s130 = smul.u32 4, %s13
      %p131 = scmp.lt.s32.totalorder %s130, 15
      %s132 = scalar_select %p131, %s130, 15
      %s133 = smul.addr %s132, 8
      %s134 = scalar_lea.vmem %s2, %s133
      %s135 = smul.u32 4, %s13
      %p136 = scmp.lt.s32.totalorder %s135, 15
      %s137 = scalar_select %p136, %s135, 15
      %s138 = smul.addr %s137, 8
      %s139 = scalar_lea.vmem %s0, %s138
      %s140 = smul.u32 4, %s13
      %s141 = smul.u32 4, %s13
      %p142 = scmp.lt.s32.totalorder %s141, 15
      %s143 = scalar_select %p142, %s141, 15
      %s144 = smul.addr %s143, 8
      %s145 = scalar_lea.vmem %s2, %s144
      %s146 = smul.u32 4, %s13
      %v147 = vld [vmem:[%s139] sm:$0xff]
      %v148 = vld [vmem:[%s139 + $0x8] sm:$0xff]
      %v149 = vld [vmem:[%s139 + $0x10] sm:$0xff]
      %v150 = vld [vmem:[%s139 + $0x18] sm:$0xff]
      %v151 = vld [vmem:[%s1] sm:$0xff]
      %v152 = vld [vmem:[%s1 + $0x8] sm:$0xff]
      %vm153 = vcmask 130048
      %v155 = vsel %vm153, %v147, 0
      %v158 = vsel %vm153, %v148, 0
      %v161 = vsel %vm153, %v149, 0
      %v164 = vsel %vm153, %v150, 0
      %166 = vmatprep.subr.mxu0 0.0
      %167 = vmatpush1.msra.mxu0 0.0
      %168 = vmatprep.subr.mxu0 0.0
      %169 = vmatpush1.msra.mxu0 0.0
      %170 = vmatprep.subr.mxu0 0.0
      %171 = vmatpush1.msra.mxu0 0.0
      %172 = vmatprep.subr.mxu0 0.0
      %173 = vmatpush1.msra.mxu0 0.0
      %174 = vmatprep.subr.mxu0 0.0
      %175 = vmatpush1.msra.mxu0 0.0
      %176 = vmatprep.subr.mxu0 0.0
      %177 = vmatpush1.msra.mxu0 0.0
      %178 = vmatprep.subr.mxu0 0.0
      %179 = vmatpush1.msra.mxu0 0.0
      %180 = vmatprep.subr.mxu0 0.0
      %181 = vmatpush1.msra.mxu0 0.0
      %182 = vmatprep.subr.mxu0 0.0
      %183 = vmatpush1.msra.mxu0 0.0
      %184 = vmatprep.subr.mxu0 0.0
      %185 = vmatpush1.msra.mxu0 0.0
      %186 = vmatprep.subr.mxu0 0.0
      %187 = vmatpush1.msra.mxu0 0.0
      %188 = vmatprep.subr.mxu0 0.0
      %189 = vmatpush1.msra.mxu0 0.0
      %190 = vmatprep.subr.mxu0 0.0
      %191 = vmatpush1.msra.mxu0 0.0
      %192 = vmatprep.subr.mxu0 0.0
      %193 = vmatpush1.msra.mxu0 0.0
      %194 = vmatprep.subr.mxu0 0.0
      %195 = vmatpush1.msra.mxu0 %v152
      %196 = vmatprep.subr.mxu0 0.0
      %197 = vmatpush1.msra.mxu0 %v151
      %198 = vmatprep.subr.mxu0 0.0
      %199 = vmatpush2.msra.mxu0 0.0
      %200 = vmatprep.subr.mxu0 0.0
      %201 = vmatpush2.msra.mxu0 0.0
      %202 = vmatprep.subr.mxu0 0.0
      %203 = vmatpush2.msra.mxu0 0.0
      %204 = vmatprep.subr.mxu0 0.0
      %205 = vmatpush2.msra.mxu0 0.0
      %206 = vmatprep.subr.mxu0 0.0
      %207 = vmatpush2.msra.mxu0 0.0
      %208 = vmatprep.subr.mxu0 0.0
      %209 = vmatpush2.msra.mxu0 0.0
      %210 = vmatprep.subr.mxu0 0.0
      %211 = vmatpush2.msra.mxu0 0.0
      %212 = vmatprep.subr.mxu0 0.0
      %213 = vmatpush2.msra.mxu0 0.0
      %214 = vmatprep.subr.mxu0 0.0
      %215 = vmatpush2.msra.mxu0 0.0
      %216 = vmatprep.subr.mxu0 0.0
      %217 = vmatpush2.msra.mxu0 0.0
      %218 = vmatprep.subr.mxu0 0.0
      %219 = vmatpush2.msra.mxu0 0.0
      %220 = vmatprep.subr.mxu0 0.0
      %221 = vmatpush2.msra.mxu0 0.0
      %222 = vmatprep.subr.mxu0 0.0
      %223 = vmatpush2.msra.mxu0 0.0
      %224 = vmatprep.subr.mxu0 0.0
      %225 = vmatpush2.msra.mxu0 0.0
      %226 = vmatprep.subr.mxu0 0.0
      %227 = vmatpush2.msra.mxu0 0.0
      %228 = vmatprep.subr.mxu0 0.0
      %229 = vmatpush2.msra.mxu0 0.0
      %230 = vmatprep.mubr.f32.mxu0 0.0
      %231 = vmatmul.mubr.f32.gmra.mxu0 %v155
      %v232 = vpop.f32.mrf.mxu0
      %v233 = vadd.f32 0.0, %v232
      %v234 = vpop.f32.mrf.mxu0
      %235 = vmatprep.mubr.f32.mxu0 0.0
      %236 = vmatmul.mubr.f32.gmra.mxu0 %v158
      %v237 = vpop.f32.mrf.mxu0
      %v238 = vadd.f32 0.0, %v237
      %v239 = vpop.f32.mrf.mxu0
      %240 = vmatprep.mubr.f32.mxu0 0.0
      %241 = vmatmul.mubr.f32.gmra.mxu0 %v161
      %v242 = vpop.f32.mrf.mxu0
      %v243 = vadd.f32 0.0, %v242
      %v244 = vpop.f32.mrf.mxu0
      %245 = vmatprep.mubr.f32.mxu0 0.0
      %246 = vmatmul.mubr.f32.gmra.mxu0 %v164
      %v247 = vpop.f32.mrf.mxu0
      %v248 = vadd.f32 0.0, %v247
      %v249 = vpop.f32.mrf.mxu0
      %250 = vdwg.mxu0
      %vm251 = vcmask 261120
      %252 = vst.msk [vmem:[%s145] sm:$0xff] %vm251, %v233
      %253 = vst.msk [vmem:[%s145 + $0x8] sm:$0xff] %vm251, %v238
      %254 = vst.msk [vmem:[%s145 + $0x10] sm:$0xff] %vm251, %v243
      %255 = vst.msk [vmem:[%s145 + $0x18] sm:$0xff] %vm251, %v248
      %260 = vrot.lane.b32.xlu0 %v233, 32
      %v261 = vpop.permute.xlu0 %260
      %262 = vrot.lane.b32.xlu0 %v238, 32
      %v263 = vpop.permute.xlu0 %262
      %264 = vrot.lane.b32.xlu0 %v243, 32
      %v265 = vpop.permute.xlu0 %264
      %266 = vrot.lane.b32.xlu0 %v248, 32
      %v267 = vpop.permute.xlu0 %266
      %vm272 = vcmask 523520
      %273 = vst.msk [vmem:[%s145] sm:$0xff] %vm272, %v261
      %274 = vst.msk [vmem:[%s145 + $0x8] sm:$0xff] %vm272, %v263
      %275 = vst.msk [vmem:[%s145 + $0x10] sm:$0xff] %vm272, %v265
      %276 = vst.msk [vmem:[%s145 + $0x18] sm:$0xff] %vm272, %v267
      %s277 = smul.u32 4, %s13
      %p278 = scmp.lt.s32.totalorder %s277, 15
      %s279 = scalar_select %p278, %s277, 15
      %s280 = smul.addr %s279, 8
      %s281 = scalar_lea.vmem %s2, %s280
      // Predicated region
      $region29: #{tpu_custom_call.1} parent=27 // pred_check
        %p282 = pneg %p78
      $region30: #{tpu_custom_call.1} parent=27 // pred_check_branch
        %284 = sbr.rel (%p282) target = $region32
      $region31: #{tpu_custom_call.1} parent=27 // pred_region
        %s285 = smul.u32 4, %s13
      $region32: #{tpu_custom_call.1} parent=27 // pred_fallthru
        _
    $region28: #{tpu_custom_call.1} parent=5 // pred_fallthru
      _
    %p286 = scmp.le.s32.totalorder 2, %s8
    // Predicated region
    $region33: #{tpu_custom_call.1} parent=5 // pred_check
      %p287 = pneg %p286
    $region34: #{tpu_custom_call.1} parent=5 // pred_check_branch
      %289 = sbr.rel (%p287) target = $region36
    $region35: #{tpu_custom_call.1} parent=5 // pred_region
      %s290 = ssub.s32 %s8, 2
      // Predicated region
      $region37: #{tpu_custom_call.1} parent=35 // pred_check
        %p291 = pneg %p84
      $region38: #{tpu_custom_call.1} parent=35 // pred_check_branch
        %293 = sbr.rel (%p291) target = $region40
      $region39: #{tpu_custom_call.1} parent=35 // pred_region
        %s294 = smul.u32 4, %s14
        %p295 = scmp.lt.s32.totalorder %s294, 15
        %s296 = scalar_select %p295, %s294, 15
        %s297 = smul.addr %s296, 8
        %s298 = scalar_lea.vmem %s2, %s297
      $region40: #{tpu_custom_call.1} parent=35 // pred_fallthru
        _
    $region36: #{tpu_custom_call.1} parent=5 // pred_fallthru
      _
  $region6: #{tpu_custom_call.1} parent=0 // loop_footer
    %s12 = sadd.s32 1, %s8
  $region7: #{tpu_custom_call.1} parent=0 // loop_footer_branch
    %7 = sbr.rel target = $region3
  $region8: #{tpu_custom_call.1} parent=0 // loop_exit
    _

</llo_original>
